<compile_context>
chip_gen: v6e
topology: v6e:2x2x1
jax: 0.10.0
libtpu: 0.0.40
codegen_flags: <defaults>
</compile_context>

<pallas_src>
import functools

import jax
import jax.numpy as jnp
from jax.experimental import pallas as pl
from jax.experimental.pallas import tpu as pltpu

INPUT_SIZE = 12
HIDDEN_SIZE = 64
OUTPUT_SIZE = 3
OUT_PAD = 128          # fc2 matmul width (VMEM only; output store is narrow)
MAX_TM = 2048          # max batch rows per grid step
MIN_TM = 16            # bf16-friendly minimum tile (when B > 16)


def _round_up(x, m):
    return (x + m - 1) // m * m


def _choose_tm(B):
    """Batch tile: multiple of 16, capped at MAX_TM, >=2 grid steps when it helps."""
    if B <= MIN_TM:
        return B                      # single block == full array (always legal)
    tm = _round_up(pl.cdiv(B, 2), MIN_TM)   # aim for 2 steps (v7x dual-TC)
    return min(tm, MAX_TM)


def mlp_kernel(x_ref, w1_ref, b1_ref, w2_ref, b2_ref, o_ref):
    # In-kernel cast of the f32 x tile to bf16 (VPU cast, compute slots idle).
    x = x_ref[...].astype(jnp.bfloat16)
    # fc1: [tm, 12](bf16) @ [12, 64](bf16) -> f32 accumulate on the MXU.
    h = jnp.dot(x, w1_ref[...], preferred_element_type=jnp.float32)
    # bias + ReLU in f32 on the VPU.
    h = jnp.maximum(h + b1_ref[...], 0.0)
    # fc2: [tm, 64](bf16) @ [64, 128](padded, bf16) -> f32 accumulate.
    y = jnp.dot(h.astype(jnp.bfloat16), w2_ref[...],
                preferred_element_type=jnp.float32)
    y = y + b2_ref[...]
    # Narrow store: only the 3 real output columns hit HBM.
    o_ref[...] = y[:, :OUTPUT_SIZE].astype(o_ref.dtype)


@functools.partial(jax.jit, static_argnames=())
def three_class_nn_forward(x, w1_t, b1, w2_t, b2):
    """Forward pass of ThreeClassNN.

    x:    [B, INPUT_SIZE]            float32
    w1_t: [INPUT_SIZE, HIDDEN_SIZE]  (transposed vs PyTorch's [out, in])
    b1:   [HIDDEN_SIZE]
    w2_t: [HIDDEN_SIZE, OUTPUT_SIZE]
    b2:   [OUTPUT_SIZE]
    returns [B, OUTPUT_SIZE] float32
    """
    B = x.shape[0]
    tm = _choose_tm(B)
    n_steps = pl.cdiv(B, tm)          # ragged last tile handled by the pipeline

    # Tiny one-time weight prep (bf16 weights, lane-padded fc2 for the MXU).
    w1_c = w1_t.astype(jnp.bfloat16)
    b1_r = b1.reshape(1, HIDDEN_SIZE).astype(jnp.float32)
    w2_c = (jnp.zeros((HIDDEN_SIZE, OUT_PAD), jnp.bfloat16)
            .at[:, :OUTPUT_SIZE].set(w2_t.astype(jnp.bfloat16)))
    b2_p = (jnp.zeros((1, OUT_PAD), jnp.float32)
            .at[0, :OUTPUT_SIZE].set(b2.reshape(-1).astype(jnp.float32)))

    return pl.pallas_call(
        mlp_kernel,
        out_shape=jax.ShapeDtypeStruct((B, OUTPUT_SIZE), jnp.float32),
        grid=(n_steps,),
        in_specs=[
            pl.BlockSpec((tm, INPUT_SIZE), lambda i: (i, 0)),           # x tile (f32)
            pl.BlockSpec((INPUT_SIZE, HIDDEN_SIZE), lambda i: (0, 0)),  # w1 (resident)
            pl.BlockSpec((1, HIDDEN_SIZE), lambda i: (0, 0)),           # b1 (resident)
            pl.BlockSpec((HIDDEN_SIZE, OUT_PAD), lambda i: (0, 0)),     # w2 (resident)
            pl.BlockSpec((1, OUT_PAD), lambda i: (0, 0)),               # b2 (resident)
        ],
        out_specs=pl.BlockSpec((tm, OUTPUT_SIZE), lambda i: (i, 0)),    # narrow store
        compiler_params=pltpu.CompilerParams(
            dimension_semantics=("parallel",)),
    )(x, w1_c, b1_r, w2_c, b2_p)


def init_params(key):
    # Mimics nn.Linear's uniform(-1/sqrt(fan_in), 1/sqrt(fan_in)) init.
    k1, k2, k3, k4 = jax.random.split(key, 4)
    bound1 = 1.0 / jnp.sqrt(INPUT_SIZE)
    bound2 = 1.0 / jnp.sqrt(HIDDEN_SIZE)
    # Stored as [in, out] so the kernel computes x @ W directly.
    w1_t = jax.random.uniform(k1, (INPUT_SIZE, HIDDEN_SIZE), jnp.float32,
                              -bound1, bound1)
    b1 = jax.random.uniform(k2, (HIDDEN_SIZE,), jnp.float32, -bound1, bound1)
    w2_t = jax.random.uniform(k3, (HIDDEN_SIZE, OUTPUT_SIZE), jnp.float32,
                              -bound2, bound2)
    b2 = jax.random.uniform(k4, (OUTPUT_SIZE,), jnp.float32, -bound2, bound2)
    return w1_t, b1, w2_t, b2


def _ref_f32(x, w1_t, b1, w2_t, b2):
    return jnp.maximum(x @ w1_t + b1[None, :], 0.0) @ w2_t + b2[None, :]


def _ref_bf16(x, w1_t, b1, w2_t, b2):
    # Same dtype strategy as the kernel: bf16 operands, f32 accumulation.
    h = jnp.dot(x.astype(jnp.bfloat16), w1_t.astype(jnp.bfloat16),
                preferred_element_type=jnp.float32)
    h = jnp.maximum(h + b1[None, :].astype(jnp.float32), 0.0)
    y = jnp.dot(h.astype(jnp.bfloat16), w2_t.astype(jnp.bfloat16),
                preferred_element_type=jnp.float32)
    return y + b2[None, :].astype(jnp.float32)


if __name__ == "__main__":
    key = jax.random.PRNGKey(0)
    pkey, xkey1, xkey2 = jax.random.split(key, 3)
    w1_t, b1, w2_t, b2 = init_params(pkey)

    ok = True
    # batch=8: single full-array block; batch=100: two grid steps + ragged tail.
    for xkey, batch in ((xkey1, 8), (xkey2, 100)):
        x = jax.random.normal(xkey, (batch, INPUT_SIZE), jnp.float32)

        out = three_class_nn_forward(x, w1_t, b1, w2_t, b2)
        out = jax.block_until_ready(out)
        assert out.shape == (batch, OUTPUT_SIZE)

        # Tight check vs a reference using the same bf16/f32 dtype strategy.
        ref_b = _ref_bf16(x, w1_t, b1, w2_t, b2)
        ok &= bool(jnp.allclose(out, ref_b, atol=2e-3, rtol=2e-3))
        # Loose sanity check vs the full-f32 PyTorch-equivalent reference.
        ref_f = _ref_f32(x, w1_t, b1, w2_t, b2)
        ok &= bool(jnp.allclose(out, ref_f, atol=5e-2, rtol=5e-2))

    assert ok
    print("KERNEL_OK")
</pallas_src>

<mosaic_0001>
module attributes {stable_mosaic.version = 11 : i64} {
  func.func @mlp_kernel(%arg0: i32, %arg1: memref<8x12xf32, #tpu.memory_space<vmem>>, %arg2: memref<12x64xbf16, #tpu.memory_space<vmem>>, %arg3: memref<1x64xf32, #tpu.memory_space<vmem>>, %arg4: memref<64x128xbf16, #tpu.memory_space<vmem>>, %arg5: memref<1x128xf32, #tpu.memory_space<vmem>>, %arg6: memref<8x3xf32, #tpu.memory_space<vmem>>) attributes {dimension_semantics = [#tpu.dimension_semantics<parallel>], iteration_bounds = array<i64: 1>, scalar_prefetch = 0 : i64, scratch_operands = 0 : i64, tpu.core_type = #tpu.core_type<tc>, window_params = [{transform_indices = @transform_0, window_bounds = array<i64: 8, 12>}, {pipeline_mode = #tpu.pipeline_mode<synchronous>, transform_indices = @transform_1, window_bounds = array<i64: 12, 64>}, {pipeline_mode = #tpu.pipeline_mode<synchronous>, transform_indices = @transform_2, window_bounds = array<i64: 1, 64>}, {pipeline_mode = #tpu.pipeline_mode<synchronous>, transform_indices = @transform_3, window_bounds = array<i64: 64, 128>}, {pipeline_mode = #tpu.pipeline_mode<synchronous>, transform_indices = @transform_4, window_bounds = array<i64: 1, 128>}, {transform_indices = @transform_5, window_bounds = array<i64: 8, 3>}]} {
    %c0 = arith.constant 0 : index
    %c0_0 = arith.constant 0 : index
    %0 = vector.load %arg1[%c0, %c0_0] : memref<8x12xf32, #tpu.memory_space<vmem>>, vector<8x12xf32>
    %1 = arith.truncf %0 : vector<8x12xf32> to vector<8x12xbf16>
    %c0_1 = arith.constant 0 : index
    %c0_2 = arith.constant 0 : index
    %2 = vector.load %arg2[%c0_1, %c0_2] : memref<12x64xbf16, #tpu.memory_space<vmem>>, vector<12x64xbf16>
    %cst = arith.constant dense<0.000000e+00> : vector<8x64xf32>
    %3 = tpu.matmul %1, %2, %cst {dimension_numbers = #tpu.dot_dimension_numbers<[1], [0], [0], [1], [0, 0, 1, 1], [], []>} : vector<8x12xbf16>, vector<12x64xbf16>, vector<8x64xf32> -> vector<8x64xf32>
    %c0_3 = arith.constant 0 : index
    %c0_4 = arith.constant 0 : index
    %4 = vector.load %arg3[%c0_3, %c0_4] : memref<1x64xf32, #tpu.memory_space<vmem>>, vector<1x64xf32>
    %5 = vector.broadcast %4 : vector<1x64xf32> to vector<8x64xf32>
    %6 = arith.addf %3, %5 : vector<8x64xf32>
    %cst_5 = arith.constant 0.000000e+00 : f32
    %7 = vector.broadcast %cst_5 : f32 to vector<8x64xf32>
    %8 = arith.maximumf %6, %7 : vector<8x64xf32>
    %9 = arith.truncf %8 : vector<8x64xf32> to vector<8x64xbf16>
    %c0_6 = arith.constant 0 : index
    %c0_7 = arith.constant 0 : index
    %10 = vector.load %arg4[%c0_6, %c0_7] : memref<64x128xbf16, #tpu.memory_space<vmem>>, vector<64x128xbf16>
    %cst_8 = arith.constant dense<0.000000e+00> : vector<8x128xf32>
    %11 = tpu.matmul %9, %10, %cst_8 {dimension_numbers = #tpu.dot_dimension_numbers<[1], [0], [0], [1], [0, 0, 1, 1], [], []>} : vector<8x64xbf16>, vector<64x128xbf16>, vector<8x128xf32> -> vector<8x128xf32>
    %c0_9 = arith.constant 0 : index
    %c0_10 = arith.constant 0 : index
    %12 = vector.load %arg5[%c0_9, %c0_10] : memref<1x128xf32, #tpu.memory_space<vmem>>, vector<1x128xf32>
    %13 = vector.broadcast %12 : vector<1x128xf32> to vector<8x128xf32>
    %14 = arith.addf %11, %13 : vector<8x128xf32>
    %15 = vector.extract_strided_slice %14 {offsets = [0, 0], sizes = [8, 3], strides = [1, 1]} : vector<8x128xf32> to vector<8x3xf32>
    %c0_11 = arith.constant 0 : index
    %c0_12 = arith.constant 0 : index
    %16 = vector.load %arg6[%c0_11, %c0_12] : memref<8x3xf32, #tpu.memory_space<vmem>>, vector<8x3xf32>
    tpu.vector_store %arg6[%c0_11, %c0_12], %15 {strides = array<i32>} : memref<8x3xf32, #tpu.memory_space<vmem>>, vector<8x3xf32>,
    return
  }
  func.func @transform_0(%arg0: i32) -> (i32, i32) {
    %c0_i32 = arith.constant 0 : i32
    %c0_i32_0 = arith.constant 0 : i32
    return %arg0, %c0_i32 : i32, i32
  }
  func.func @transform_1(%arg0: i32) -> (i32, i32) {
    %c0_i32 = arith.constant 0 : i32
    %c0_i32_0 = arith.constant 0 : i32
    %c0_i32_1 = arith.constant 0 : i32
    return %c0_i32, %c0_i32_0 : i32, i32
  }
  func.func @transform_2(%arg0: i32) -> (i32, i32) {
    %c0_i32 = arith.constant 0 : i32
    %c0_i32_0 = arith.constant 0 : i32
    %c0_i32_1 = arith.constant 0 : i32
    return %c0_i32, %c0_i32_0 : i32, i32
  }
  func.func @transform_3(%arg0: i32) -> (i32, i32) {
    %c0_i32 = arith.constant 0 : i32
    %c0_i32_0 = arith.constant 0 : i32
    %c0_i32_1 = arith.constant 0 : i32
    return %c0_i32, %c0_i32_0 : i32, i32
  }
  func.func @transform_4(%arg0: i32) -> (i32, i32) {
    %c0_i32 = arith.constant 0 : i32
    %c0_i32_0 = arith.constant 0 : i32
    %c0_i32_1 = arith.constant 0 : i32
    return %c0_i32, %c0_i32_0 : i32, i32
  }
  func.func @transform_5(%arg0: i32) -> (i32, i32) {
    %c0_i32 = arith.constant 0 : i32
    %c0_i32_0 = arith.constant 0 : i32
    return %arg0, %c0_i32 : i32, i32
  }
}

</mosaic_0001>

<llo_original>
// kernel: three_class_nn_forward.1
$region0: #{three_class_nn_forward.1}
  #allocation0 [shape = 'u32[]', space=smem, size = 0x4, offset = 0x4, fixed_abs, tag = 'smem constant byte address 0x4 - core index']
  #allocation1 [shape = 'u32[144,128]{1,0:T(1,128)}', space=vmem, size = 0x12000, scoped, tag = 'internal scratch']
  %s0 = inlined_call_operand.vmem [shape: f32[8,12], index: 0, kind: input, shape index: {}]
  %s1 = inlined_call_operand.vmem [shape: bf16[12,64], index: 1, kind: input, shape index: {}]
  %s2 = inlined_call_operand.vmem [shape: f32[1,64], index: 2, kind: input, shape index: {}]
  %s3 = inlined_call_operand.vmem [shape: bf16[64,128], index: 3, kind: input, shape index: {}]
  %s4 = inlined_call_operand.vmem [shape: f32[1,128], index: 4, kind: input, shape index: {}]
  %s5 = inlined_call_operand.vmem [shape: f32[8,3], index: 5, kind: output, shape index: {}]
  %s6 = sld [smem:[#allocation0]]
  $region30: #{three_class_nn_forward.1} parent=0
    _
  %s8 = ssub.s32 1, %s6
  %s9 = scalar_select 0, %s8, %s6
  // Predicated region
  $region2: #{three_class_nn_forward.1} parent=0 // pred_check
    _
  $region3: #{three_class_nn_forward.1} parent=0 // pred_check_branch
    %11 = sbr.rel (0) target = $region5
  $region4: #{three_class_nn_forward.1} parent=0 // pred_region
    _
  $region5: #{three_class_nn_forward.1} parent=0 // pred_fallthru
    _
  // Predicated region
  $region6: #{three_class_nn_forward.1} parent=0 // pred_check
    _
  $region7: #{three_class_nn_forward.1} parent=0 // pred_check_branch
    %13 = sbr.rel (0) target = $region9
  $region8: #{three_class_nn_forward.1} parent=0 // pred_region
    _
  $region9: #{three_class_nn_forward.1} parent=0 // pred_fallthru
    _
  // Predicated region
  $region10: #{three_class_nn_forward.1} parent=0 // pred_check
    _
  $region11: #{three_class_nn_forward.1} parent=0 // pred_check_branch
    %15 = sbr.rel (0) target = $region13
  $region12: #{three_class_nn_forward.1} parent=0 // pred_region
    _
  $region13: #{three_class_nn_forward.1} parent=0 // pred_fallthru
    _
  // Predicated region
  $region14: #{three_class_nn_forward.1} parent=0 // pred_check
    _
  $region15: #{three_class_nn_forward.1} parent=0 // pred_check_branch
    %17 = sbr.rel (0) target = $region17
  $region16: #{three_class_nn_forward.1} parent=0 // pred_region
    _
  $region17: #{three_class_nn_forward.1} parent=0 // pred_fallthru
    _
  // Predicated region
  $region18: #{three_class_nn_forward.1} parent=0 // pred_check
    _
  $region19: #{three_class_nn_forward.1} parent=0 // pred_check_branch
    %19 = sbr.rel (0) target = $region21
  $region20: #{three_class_nn_forward.1} parent=0 // pred_region
    _
  $region21: #{three_class_nn_forward.1} parent=0 // pred_fallthru
    _
  %v21 = vld [vmem:[%s0] sm:$0xff]
  %v22 = vpack.c.bf16 %v21, %v21
  %v23 = vld [vmem:[%s1] sm:$0xf]
  %v24 = vld [vmem:[%s1 + $0x4] sm:$0x3]
  %v25 = vld [vmem:[%s2] sm:$0x1]
  %v27 = vlaneseq
  %v28 = vshrl.u32 %v27, 7
  %v29 = vsub.s32 0, %v28
  %v30 = vrot.slane %v25, %v29
  %v34 = vunpack.c.l.b16 %v23
  %v35 = vunpack.c.l.b16 %v24
  %v36 = vpack.c.b16 %v35, %v34
  %vm37 = vcmask 97280
  %v39 = vsel %vm37, %v22, 0
  %vm41 = vcmask 1045504
  %v43 = vsel %vm41, %v36, 0
  %45 = vmatprep.subr.bf16.mxu0 0
  %46 = vmatpush1.bf16.msra.mxu0 0
  %47 = vmatprep.subr.bf16.mxu0 0
  %48 = vmatpush1.bf16.msra.mxu0 0
  %49 = vmatprep.subr.bf16.mxu0 0
  %50 = vmatpush1.bf16.msra.mxu0 0
  %51 = vmatprep.subr.bf16.mxu0 0
  %52 = vmatpush1.bf16.msra.mxu0 0
  %53 = vmatprep.subr.bf16.mxu0 0
  %54 = vmatpush1.bf16.msra.mxu0 0
  %55 = vmatprep.subr.bf16.mxu0 0
  %56 = vmatpush1.bf16.msra.mxu0 0
  %57 = vmatprep.subr.bf16.mxu0 0
  %58 = vmatpush1.bf16.msra.mxu0 0
  %59 = vmatprep.subr.bf16.mxu0 0
  %60 = vmatpush1.bf16.msra.mxu0 %v43
  %61 = vmatprep.subr.bf16.mxu0 0
  %62 = vmatpush2.bf16.msra.mxu0 0
  %63 = vmatprep.subr.bf16.mxu0 0
  %64 = vmatpush2.bf16.msra.mxu0 0
  %65 = vmatprep.subr.bf16.mxu0 0
  %66 = vmatpush2.bf16.msra.mxu0 0
  %67 = vmatprep.subr.bf16.mxu0 0
  %68 = vmatpush2.bf16.msra.mxu0 0
  %69 = vmatprep.subr.bf16.mxu0 0
  %70 = vmatpush2.bf16.msra.mxu0 0
  %71 = vmatprep.subr.bf16.mxu0 0
  %72 = vmatpush2.bf16.msra.mxu0 0
  %73 = vmatprep.subr.bf16.mxu0 0
  %74 = vmatpush2.bf16.msra.mxu0 0
  %75 = vmatprep.subr.bf16.mxu0 0
  %76 = vmatpush2.bf16.msra.mxu0 0
  %77 = vmatprep.mubr.bf16.mxu0 0
  %78 = vmatmul.mubr.bf16.gmra.mxu0 %v39
  %v79 = vpop.f32.mrf.mxu0
  %v80 = vadd.f32 %v30, %v79
  %v81 = vpop.f32.mrf.mxu0
  %v82 = vpop.f32.mrf.mxu0
  %v83 = vpop.f32.mrf.mxu0
  %84 = vdwg.mxu0
  %v85 = vmax.f32 %v80, 0.0
  %v86 = vpack.c.bf16 %v85, %v85
  %v87 = vld [vmem:[%s3] sm:$0xf]
  %v88 = vld [vmem:[%s3 + $0x4] sm:$0xf]
  %v89 = vld [vmem:[%s3 + $0x8] sm:$0xf]
  %v90 = vld [vmem:[%s3 + $0xc] sm:$0xf]
  %v91 = vld [vmem:[%s3 + $0x10] sm:$0xf]
  %v92 = vld [vmem:[%s3 + $0x14] sm:$0xf]
  %v93 = vld [vmem:[%s3 + $0x18] sm:$0xf]
  %v94 = vld [vmem:[%s3 + $0x1c] sm:$0xf]
  %v95 = vld [vmem:[%s4] sm:$0x1]
  %v97 = vlaneseq
  %v98 = vshrl.u32 %v97, 7
  %v99 = vsub.s32 0, %v98
  %v100 = vrot.slane %v95, %v99
  %v110 = vunpack.c.l.b16 %v87
  %v111 = vunpack.c.l.b16 %v88
  %v112 = vunpack.c.l.b16 %v89
  %v113 = vunpack.c.l.b16 %v90
  %v114 = vunpack.c.l.b16 %v91
  %v115 = vunpack.c.l.b16 %v92
  %v116 = vunpack.c.l.b16 %v93
  %v117 = vunpack.c.l.b16 %v94
  %v118 = vpack.c.b16 %v111, %v110
  %v119 = vpack.c.b16 %v113, %v112
  %v120 = vpack.c.b16 %v115, %v114
  %v121 = vpack.c.b16 %v117, %v116
  %vm126 = vcmask 523264
  %v128 = vsel %vm126, %v86, 0
  %130 = vmatprep.subr.bf16.mxu0 0
  %131 = vmatpush1.bf16.msra.mxu0 0
  %132 = vmatprep.subr.bf16.mxu0 0
  %133 = vmatpush1.bf16.msra.mxu0 0
  %134 = vmatprep.subr.bf16.mxu0 0
  %135 = vmatpush1.bf16.msra.mxu0 0
  %136 = vmatprep.subr.bf16.mxu0 0
  %137 = vmatpush1.bf16.msra.mxu0 0
  %138 = vmatprep.subr.bf16.mxu0 0
  %139 = vmatpush1.bf16.msra.mxu0 %v121
  %140 = vmatprep.subr.bf16.mxu0 0
  %141 = vmatpush1.bf16.msra.mxu0 %v120
  %142 = vmatprep.subr.bf16.mxu0 0
  %143 = vmatpush1.bf16.msra.mxu0 %v119
  %144 = vmatprep.subr.bf16.mxu0 0
  %145 = vmatpush1.bf16.msra.mxu0 %v118
  %146 = vmatprep.subr.bf16.mxu0 0
  %147 = vmatpush2.bf16.msra.mxu0 0
  %148 = vmatprep.subr.bf16.mxu0 0
  %149 = vmatpush2.bf16.msra.mxu0 0
  %150 = vmatprep.subr.bf16.mxu0 0
  %151 = vmatpush2.bf16.msra.mxu0 0
  %152 = vmatprep.subr.bf16.mxu0 0
  %153 = vmatpush2.bf16.msra.mxu0 0
  %154 = vmatprep.subr.bf16.mxu0 0
  %155 = vmatpush2.bf16.msra.mxu0 0
  %156 = vmatprep.subr.bf16.mxu0 0
  %157 = vmatpush2.bf16.msra.mxu0 0
  %158 = vmatprep.subr.bf16.mxu0 0
  %159 = vmatpush2.bf16.msra.mxu0 0
  %160 = vmatprep.subr.bf16.mxu0 0
  %161 = vmatpush2.bf16.msra.mxu0 0
  %162 = vmatprep.mubr.bf16.mxu0 0
  %163 = vmatmul.mubr.bf16.gmra.mxu0 %v128
  %v164 = vpop.f32.mrf.mxu0
  %v165 = vadd.f32 %v100, %v164
  %v166 = vpop.f32.mrf.mxu0
  %v167 = vpop.f32.mrf.mxu0
  %v168 = vpop.f32.mrf.mxu0
  %169 = vdwg.mxu0
  %vm170 = vcmask 23552
  %171 = vst.msk [vmem:[%s5] sm:$0xff] %vm170, %v165
  // Predicated region
  $region22: #{three_class_nn_forward.1} parent=0 // pred_check
    _
  $region23: #{three_class_nn_forward.1} parent=0 // pred_check_branch
    %173 = sbr.rel (0) target = $region25
  $region24: #{three_class_nn_forward.1} parent=0 // pred_region
    _
  $region25: #{three_class_nn_forward.1} parent=0 // pred_fallthru
    _
  // Predicated region
  $region26: #{three_class_nn_forward.1} parent=0 // pred_check
    _
  $region27: #{three_class_nn_forward.1} parent=0 // pred_check_branch
    %175 = sbr.rel (0) target = $region29
  $region28: #{three_class_nn_forward.1} parent=0 // pred_region
    _
  $region29: #{three_class_nn_forward.1} parent=0 // pred_fallthru
    _

</llo_original>
